<compile_context>
chip_gen: v7x
topology: tpu7x:2x2x1
jax: 0.10.0
libtpu: 0.0.40
codegen_flags: <defaults>
</compile_context>

<pallas_src>
import functools

import jax
import jax.numpy as jnp
import numpy as np
from jax.experimental import pallas as pl
from jax.experimental.pallas import tpu as pltpu


def _round_up(x, m):
    return ((x + m - 1) // m) * m


def output_block_kernel(x_ref, res_ref, w_ref, p_ref, out_ref, *, eps, matmul_dtype):
    """One (bm, H) row tile: dense -> residual -> TF-style LayerNorm."""
    x = x_ref[...]                                  # (bm, H) native dtype
    res = res_ref[...].astype(jnp.float32)          # (bm, H) residual rows
    p = p_ref[...]                                  # (8, H) f32 packed params
    bias = p[0:1, :]                                # dense bias
    ln_w = p[1:2, :]                                # LayerNorm weight
    ln_b = p[2:3, :]                                # LayerNorm bias

    # Dense layer on the MXU: matmul_dtype inputs, f32 accumulation.
    y = jnp.dot(x.astype(matmul_dtype), w_ref[...],
                preferred_element_type=jnp.float32) + bias

    # StableDropout is identity at inference time.
    h = y + res

    # TF-style LayerNorm in f32 (eps inside the sqrt); single-pass stats; rsqrt -> EUP.
    mean = jnp.mean(h, axis=-1, keepdims=True)
    mean_sq = jnp.mean(h * h, axis=-1, keepdims=True)
    var = jnp.maximum(mean_sq - mean * mean, 0.0)
    xn = (h - mean) * jax.lax.rsqrt(var + eps)
    out_ref[...] = (ln_w * xn + ln_b).astype(out_ref.dtype)


def dense_self_attention_output_block(hidden_states, input_tensor, params, *,
                                      eps=1e-12, block_rows=512,
                                      matmul_dtype=jnp.bfloat16):
    """hidden_states, input_tensor: (B, S, H). params['w']: PyTorch layout (out, in)."""
    B, S, H = hidden_states.shape
    rows = B * S
    out_dtype = hidden_states.dtype

    # Flatten batch*seq into rows (row-wise op, exact) and keep native dtypes so the
    # kernel's HBM traffic is not inflated by wrapper-side upcast passes.
    x = hidden_states.reshape(rows, H)
    r = input_tensor.reshape(rows, H)

    # Pre-transpose nn.Linear weight to (in, out) so the kernel computes x @ Wt + b,
    # and pre-cast it to the MXU dtype (halves weight DMA/VMEM bytes). Resident in VMEM.
    wt = jnp.asarray(params["w"]).T.astype(matmul_dtype)          # (H, H)

    # Pack the three per-feature vectors into one sublane-aligned (8, H) f32 slab:
    #   row 0: dense bias, row 1: LN weight, row 2: LN bias, rows 3..7: zero pad.
    pvec = jnp.stack([
        jnp.asarray(params["b"]).astype(jnp.float32),
        jnp.asarray(params["ln_w"]).astype(jnp.float32),
        jnp.asarray(params["ln_b"]).astype(jnp.float32),
    ], axis=0)
    pvec = jnp.pad(pvec, ((0, 8 - pvec.shape[0]), (0, 0)))        # (8, H)

    # Row tiling: sublane dim multiple of 8.  Give the pipeline (and v7x's two
    # TensorCores) at least 2 grid steps whenever the row count allows it.
    bm = min(block_rows, _round_up(rows, 8))
    if rows >= 16:
        bm = min(bm, _round_up(pl.cdiv(rows, 2), 8))
    bm = max(8, _round_up(bm, 8))
    grid = (pl.cdiv(rows, bm),)        # ragged tail handled by OOB write masking

    row_spec = pl.BlockSpec((bm, H), lambda i: (i, 0))
    w_spec = pl.BlockSpec((H, H), lambda i: (0, 0))    # resident weight
    p_spec = pl.BlockSpec((8, H), lambda i: (0, 0))    # resident packed params

    # Right-size the scoped VMEM budget: double-buffered row tiles + resident params,
    # with generous margin, capped well under v7x's 64 MiB physical VMEM.
    per_step = bm * H * (jnp.dtype(x.dtype).itemsize
                         + jnp.dtype(r.dtype).itemsize
                         + jnp.dtype(out_dtype).itemsize)
    resident = H * H * jnp.dtype(matmul_dtype).itemsize + 8 * H * 4
    vmem_limit = int(min(32 * 1024 * 1024,
                         max(4 * 1024 * 1024, 4 * (2 * per_step + 2 * resident))))

    kernel = functools.partial(output_block_kernel, eps=eps, matmul_dtype=matmul_dtype)

    out = pl.pallas_call(
        kernel,
        out_shape=jax.ShapeDtypeStruct((rows, H), out_dtype),
        grid=grid,
        in_specs=[
            row_spec,   # hidden_states rows
            row_spec,   # input_tensor rows (residual)
            w_spec,     # dense weight (in, out), matmul dtype
            p_spec,     # packed [bias; ln_w; ln_b] f32
        ],
        out_specs=row_spec,
        compiler_params=pltpu.CompilerParams(
            dimension_semantics=("parallel",),
            vmem_limit_bytes=vmem_limit,
        ),
    )(x, r, wt, pvec)

    return out.reshape(B, S, H)


def reference_block(hidden_states, input_tensor, params, *, eps=1e-12):
    """Pure-JAX f32 reference mirroring the PyTorch forward (eval mode)."""
    y = hidden_states @ jnp.asarray(params["w"]).T + params["b"]
    h = y + input_tensor
    mean = jnp.mean(h, axis=-1, keepdims=True)
    var = jnp.mean((h - mean) ** 2, axis=-1, keepdims=True)
    xn = (h - mean) / jnp.sqrt(var + eps)
    return params["ln_w"] * xn + params["ln_b"]


if __name__ == "__main__":
    # Small shapes consistent with the module; H = 128 keeps the lane dim dense.
    B, S, H = 2, 8, 128
    eps = 1e-12

    key = jax.random.PRNGKey(0)
    k_x, k_r, k_w, k_b, k_lw, k_lb = jax.random.split(key, 6)

    hidden_states = jax.random.normal(k_x, (B, S, H), dtype=jnp.float32)
    input_tensor = jax.random.normal(k_r, (B, S, H), dtype=jnp.float32)

    params = {
        # PyTorch nn.Linear layout: weight (out_features, in_features), bias (out_features,)
        "w": jax.random.normal(k_w, (H, H), dtype=jnp.float32) / jnp.sqrt(float(H)),
        "b": 0.02 * jax.random.normal(k_b, (H,), dtype=jnp.float32),
        # LIMoELayerNorm params (init ones/zeros; perturbed to exercise scale/shift)
        "ln_w": 1.0 + 0.1 * jax.random.normal(k_lw, (H,), dtype=jnp.float32),
        "ln_b": 0.02 * jax.random.normal(k_lb, (H,), dtype=jnp.float32),
    }

    out = dense_self_attention_output_block(hidden_states, input_tensor, params, eps=eps)
    out = jax.block_until_ready(out)

    ref = reference_block(hidden_states, input_tensor, params, eps=eps)
    ref = jax.block_until_ready(ref)

    assert out.shape == (B, S, H)
    # Tolerance loosened vs. pure-f32 because the dense matmul runs bf16 on the MXU
    # (with f32 accumulation); LN / residual math remains f32.
    np.testing.assert_allclose(np.asarray(out), np.asarray(ref), rtol=3e-2, atol=3e-2)
    print("KERNEL_OK")
</pallas_src>

<mosaic_0001>
module attributes {stable_mosaic.version = 11 : i64} {
  func.func @output_block_kernel(%arg0: i32, %arg1: memref<8x128xf32, #tpu.memory_space<vmem>>, %arg2: memref<8x128xf32, #tpu.memory_space<vmem>>, %arg3: memref<128x128xbf16, #tpu.memory_space<vmem>>, %arg4: memref<8x128xf32, #tpu.memory_space<vmem>>, %arg5: memref<8x128xf32, #tpu.memory_space<vmem>>) attributes {dimension_semantics = [#tpu.dimension_semantics<parallel>], iteration_bounds = array<i64: 2>, scalar_prefetch = 0 : i64, scratch_operands = 0 : i64, tpu.core_type = #tpu.core_type<tc>, window_params = [{transform_indices = @transform_0, window_bounds = array<i64: 8, 128>}, {transform_indices = @transform_1, window_bounds = array<i64: 8, 128>}, {pipeline_mode = #tpu.pipeline_mode<synchronous>, transform_indices = @transform_2, window_bounds = array<i64: 128, 128>}, {pipeline_mode = #tpu.pipeline_mode<synchronous>, transform_indices = @transform_3, window_bounds = array<i64: 8, 128>}, {transform_indices = @transform_4, window_bounds = array<i64: 8, 128>}]} {
    %c0 = arith.constant 0 : index
    %c0_0 = arith.constant 0 : index
    %0 = vector.load %arg1[%c0, %c0_0] : memref<8x128xf32, #tpu.memory_space<vmem>>, vector<8x128xf32>
    %c0_1 = arith.constant 0 : index
    %c0_2 = arith.constant 0 : index
    %1 = vector.load %arg2[%c0_1, %c0_2] : memref<8x128xf32, #tpu.memory_space<vmem>>, vector<8x128xf32>
    %c0_3 = arith.constant 0 : index
    %c0_4 = arith.constant 0 : index
    %2 = vector.load %arg4[%c0_3, %c0_4] : memref<8x128xf32, #tpu.memory_space<vmem>>, vector<8x128xf32>
    %3 = vector.extract_strided_slice %2 {offsets = [0, 0], sizes = [1, 128], strides = [1, 1]} : vector<8x128xf32> to vector<1x128xf32>
    %4 = vector.extract_strided_slice %2 {offsets = [1, 0], sizes = [1, 128], strides = [1, 1]} : vector<8x128xf32> to vector<1x128xf32>
    %5 = vector.extract_strided_slice %2 {offsets = [2, 0], sizes = [1, 128], strides = [1, 1]} : vector<8x128xf32> to vector<1x128xf32>
    %6 = arith.truncf %0 : vector<8x128xf32> to vector<8x128xbf16>
    %c0_5 = arith.constant 0 : index
    %c0_6 = arith.constant 0 : index
    %7 = vector.load %arg3[%c0_5, %c0_6] : memref<128x128xbf16, #tpu.memory_space<vmem>>, vector<128x128xbf16>
    %cst = arith.constant dense<0.000000e+00> : vector<8x128xf32>
    %8 = tpu.matmul %6, %7, %cst {dimension_numbers = #tpu.dot_dimension_numbers<[1], [0], [0], [1], [0, 0, 1, 1], [], []>} : vector<8x128xbf16>, vector<128x128xbf16>, vector<8x128xf32> -> vector<8x128xf32>
    %9 = vector.broadcast %3 : vector<1x128xf32> to vector<8x128xf32>
    %10 = arith.addf %8, %9 : vector<8x128xf32>
    %11 = arith.addf %10, %1 : vector<8x128xf32>
    %cst_7 = arith.constant dense<0.000000e+00> : vector<8xf32>
    %12 = vector.multi_reduction <add>, %11, %cst_7 [1] : vector<8x128xf32> to vector<8xf32>
    %13 = vector.shape_cast %12 : vector<8xf32> to vector<8x1xf32>
    %cst_8 = arith.constant 1.280000e+02 : f32
    %14 = vector.broadcast %cst_8 : f32 to vector<8x1xf32>
    %15 = arith.divf %13, %14 : vector<8x1xf32>
    %16 = arith.mulf %11, %11 : vector<8x128xf32>
    %cst_9 = arith.constant dense<0.000000e+00> : vector<8xf32>
    %17 = vector.multi_reduction <add>, %16, %cst_9 [1] : vector<8x128xf32> to vector<8xf32>
    %18 = vector.shape_cast %17 : vector<8xf32> to vector<8x1xf32>
    %cst_10 = arith.constant 1.280000e+02 : f32
    %19 = vector.broadcast %cst_10 : f32 to vector<8x1xf32>
    %20 = arith.divf %18, %19 : vector<8x1xf32>
    %21 = arith.mulf %15, %15 : vector<8x1xf32>
    %22 = arith.subf %20, %21 : vector<8x1xf32>
    %cst_11 = arith.constant 0.000000e+00 : f32
    %23 = vector.broadcast %cst_11 : f32 to vector<8x1xf32>
    %24 = arith.maximumf %22, %23 : vector<8x1xf32>
    %25 = vector.broadcast %15 : vector<8x1xf32> to vector<8x128xf32>
    %26 = arith.subf %11, %25 : vector<8x128xf32>
    %cst_12 = arith.constant 9.99999996E-13 : f32
    %27 = vector.broadcast %cst_12 : f32 to vector<8x1xf32>
    %28 = arith.addf %24, %27 : vector<8x1xf32>
    %29 = math.rsqrt %28 : vector<8x1xf32>
    %30 = vector.broadcast %29 : vector<8x1xf32> to vector<8x128xf32>
    %31 = arith.mulf %26, %30 : vector<8x128xf32>
    %32 = vector.broadcast %4 : vector<1x128xf32> to vector<8x128xf32>
    %33 = arith.mulf %32, %31 : vector<8x128xf32>
    %34 = vector.broadcast %5 : vector<1x128xf32> to vector<8x128xf32>
    %35 = arith.addf %33, %34 : vector<8x128xf32>
    %c0_13 = arith.constant 0 : index
    %c0_14 = arith.constant 0 : index
    %36 = vector.load %arg5[%c0_13, %c0_14] : memref<8x128xf32, #tpu.memory_space<vmem>>, vector<8x128xf32>
    tpu.vector_store %arg5[%c0_13, %c0_14], %35 {strides = array<i32>} : memref<8x128xf32, #tpu.memory_space<vmem>>, vector<8x128xf32>,
    return
  }
  func.func @transform_0(%arg0: i32) -> (i32, i32) {
    %c0_i32 = arith.constant 0 : i32
    %c0_i32_0 = arith.constant 0 : i32
    return %arg0, %c0_i32 : i32, i32
  }
  func.func @transform_1(%arg0: i32) -> (i32, i32) {
    %c0_i32 = arith.constant 0 : i32
    %c0_i32_0 = arith.constant 0 : i32
    return %arg0, %c0_i32 : i32, i32
  }
  func.func @transform_2(%arg0: i32) -> (i32, i32) {
    %c0_i32 = arith.constant 0 : i32
    %c0_i32_0 = arith.constant 0 : i32
    %c0_i32_1 = arith.constant 0 : i32
    return %c0_i32, %c0_i32_0 : i32, i32
  }
  func.func @transform_3(%arg0: i32) -> (i32, i32) {
    %c0_i32 = arith.constant 0 : i32
    %c0_i32_0 = arith.constant 0 : i32
    %c0_i32_1 = arith.constant 0 : i32
    return %c0_i32, %c0_i32_0 : i32, i32
  }
  func.func @transform_4(%arg0: i32) -> (i32, i32) {
    %c0_i32 = arith.constant 0 : i32
    %c0_i32_0 = arith.constant 0 : i32
    return %arg0, %c0_i32 : i32, i32
  }
}

</mosaic_0001>

<llo_original>
// kernel: tpu_custom_call.1
$region0: #{tpu_custom_call.1}
  #allocation0 [shape = 'u32[]', space=smem, size = 0x4, offset = 0x4, fixed_abs, tag = 'smem constant byte address 0x4 - core index']
  #allocation1 [shape = 'u32[144,128]{1,0:T(1,128)}', space=vmem, size = 0x12000, scoped, tag = 'internal scratch']
  %s0 = inlined_call_operand.hbm [shape: f32[16,128], index: 0, kind: input, shape index: {}]
  %s1 = inlined_call_operand.hbm [shape: f32[16,128], index: 1, kind: input, shape index: {}]
  %s2 = inlined_call_operand.hbm [shape: bf16[128,128], index: 2, kind: input, shape index: {}]
  %s3 = inlined_call_operand.vmem [shape: f32[8,128], index: 3, kind: input, shape index: {}]
  %s4 = inlined_call_operand.hbm [shape: f32[16,128], index: 4, kind: output, shape index: {}]
  %s5 = sld [smem:[#allocation0]]
  $region61: #{tpu_custom_call.1} parent=0
    _
  %s7 = ssub.s32 1, %s5
  %s8 = scalar_select 0, %s7, %s5
  $region1: #{tpu_custom_call.1} parent=0
    #allocation2 [shape = 'u8[8192]{0}', space=vmem, size = 0x2000, scoped, tag = 'input window, operand 0']
    #allocation3 [shape = 's32[2]{0}', space=sflag, size = 0x8, scoped, tag = 'scoped memory for tpu_custom_call.1']
    #allocation4 [shape = 's32[2]{0}', space=sflag, size = 0x8, scoped, tag = 'scoped memory for tpu_custom_call.1']
    #allocation5 [shape = 'u8[8192]{0}', space=vmem, size = 0x2000, scoped, tag = 'input window, operand 1']
    #allocation6 [shape = 's32[2]{0}', space=sflag, size = 0x8, scoped, tag = 'scoped memory for tpu_custom_call.1']
    #allocation7 [shape = 'u8[32768]{0}', space=vmem, size = 0x8000, scoped, tag = 'input window, operand 2, single buffered']
    #allocation8 [shape = 'u8[8192]{0}', space=vmem, size = 0x2000, scoped, tag = 'output window, operand 0']
    %9 = vsyncpa [#allocation3], 0
    %s10 = scalar_lea.sflag [#allocation3], 1
    %11 = vsyncpa %s10, 0
    %12 = vsyncpa [#allocation6], 0
    %s13 = scalar_lea.sflag [#allocation6], 1
    %14 = vsyncpa %s13, 0
    %15 = vsyncpa [#allocation4], 0
    %s16 = scalar_lea.sflag [#allocation4], 1
    %17 = vsyncpa %s16, 0
    loop: start=0, step=1, limit=4
    $region2: #{tpu_custom_call.1} parent=1 // loop_pre_header
      _
    $region3: #{tpu_custom_call.1} parent=1 // loop_header
      %s19 = sphi 0, %s23
      %p20 = scmp.ge.s32.totalorder %s19, 4
      %s29 = sphi 0, %s31
      %s32 = sphi 0, %s29
      %s33 = sphi 0, %s32
      %s49 = sphi 0, %s33
      %s55 = sphi 0, %s57
      %s58 = sphi 0, %s55
      %s59 = sphi 0, %s58
      %s75 = sphi 0, %s59
      %s79 = sphi 0, %s79
      %s81 = sphi 0, %s79
      %s82 = sphi 0, %s81
      %s96 = sphi 0, %s82
      %s100 = sphi 0, %s100
      %s102 = sphi 0, %s100
      %s103 = sphi 0, %s102
      %s117 = sphi 0, %s103
      %s123 = sphi 0, %s125
      %s126 = sphi 0, %s123
      %s127 = sphi 0, %s126
      %s143 = sphi 0, %s127
    $region4: #{tpu_custom_call.1} parent=1 // loop_header_branch
      %22 = sbr.rel (%p20) target = $region8
    $region5: #{tpu_custom_call.1} parent=1 // loop_body
      %s24 = ssub.s32 %s19, 1
      %s25 = ssub.s32 %s19, 2
      %s26 = sadd.s32 %s19, 1
      %s27 = ssub.s32 %s19, %s26
      %p28 = scmp.eq.s32.totalorder %s27, 0
      %s30 = sadd.s32 %s29, 1
      %s31 = scalar_select %p28, %s29, %s30
      %p34 = pneg %p28
      %p35 = scmp.eq.s32.totalorder %s19, 1
      %p36 = por %p34, %p35
      %p37 = scmp.ne.s32.totalorder %s29, %s32
      %p38 = scmp.eq.s32.totalorder %s19, 0
      %p39 = por %p37, %p38
      %p40 = scmp.ne.s32.totalorder %s29, %s32
      %p41 = scmp.eq.s32.totalorder %s24, 1
      %p42 = por %p40, %p41
      %p43 = scmp.ne.s32.totalorder %s32, %s33
      %p44 = scmp.eq.s32.totalorder %s24, 0
      %p45 = por %p43, %p44
      %p46 = scmp.ne.s32.totalorder %s32, %s33
      %p47 = scmp.eq.s32.totalorder %s25, 1
      %p48 = por %p46, %p47
      %p50 = scmp.ne.s32.totalorder %s33, %s49
      %p51 = scmp.eq.s32.totalorder %s25, 0
      %p52 = por %p50, %p51
      %s53 = ssub.s32 %s19, %s26
      %p54 = scmp.eq.s32.totalorder %s53, 0
      %s56 = sadd.s32 %s55, 1
      %s57 = scalar_select %p54, %s55, %s56
      %p60 = pneg %p54
      %p61 = scmp.eq.s32.totalorder %s19, 1
      %p62 = por %p60, %p61
      %p63 = scmp.ne.s32.totalorder %s55, %s58
      %p64 = scmp.eq.s32.totalorder %s19, 0
      %p65 = por %p63, %p64
      %p66 = scmp.ne.s32.totalorder %s55, %s58
      %p67 = scmp.eq.s32.totalorder %s24, 1
      %p68 = por %p66, %p67
      %p69 = scmp.ne.s32.totalorder %s58, %s59
      %p70 = scmp.eq.s32.totalorder %s24, 0
      %p71 = por %p69, %p70
      %p72 = scmp.ne.s32.totalorder %s58, %s59
      %p73 = scmp.eq.s32.totalorder %s25, 1
      %p74 = por %p72, %p73
      %p76 = scmp.ne.s32.totalorder %s59, %s75
      %p77 = scmp.eq.s32.totalorder %s25, 0
      %p78 = por %p76, %p77
      %s80 = sadd.s32 %s79, 1
      %p83 = scmp.eq.s32.totalorder %s19, 1
      %p84 = scmp.ne.s32.totalorder %s79, %s81
      %p85 = scmp.eq.s32.totalorder %s19, 0
      %p86 = por %p84, %p85
      %p87 = scmp.ne.s32.totalorder %s79, %s81
      %p88 = scmp.eq.s32.totalorder %s24, 1
      %p89 = por %p87, %p88
      %p90 = scmp.ne.s32.totalorder %s81, %s82
      %p91 = scmp.eq.s32.totalorder %s24, 0
      %p92 = por %p90, %p91
      %p93 = scmp.ne.s32.totalorder %s81, %s82
      %p94 = scmp.eq.s32.totalorder %s25, 1
      %p95 = por %p93, %p94
      %p97 = scmp.ne.s32.totalorder %s82, %s96
      %p98 = scmp.eq.s32.totalorder %s25, 0
      %p99 = por %p97, %p98
      %s101 = sadd.s32 %s100, 1
      %p104 = scmp.eq.s32.totalorder %s19, 1
      %p105 = scmp.ne.s32.totalorder %s100, %s102
      %p106 = scmp.eq.s32.totalorder %s19, 0
      %p107 = por %p105, %p106
      %p108 = scmp.ne.s32.totalorder %s100, %s102
      %p109 = scmp.eq.s32.totalorder %s24, 1
      %p110 = por %p108, %p109
      %p111 = scmp.ne.s32.totalorder %s102, %s103
      %p112 = scmp.eq.s32.totalorder %s24, 0
      %p113 = por %p111, %p112
      %p114 = scmp.ne.s32.totalorder %s102, %s103
      %p115 = scmp.eq.s32.totalorder %s25, 1
      %p116 = por %p114, %p115
      %p118 = scmp.ne.s32.totalorder %s103, %s117
      %p119 = scmp.eq.s32.totalorder %s25, 0
      %p120 = por %p118, %p119
      %s121 = ssub.s32 %s19, %s26
      %p122 = scmp.eq.s32.totalorder %s121, 0
      %s124 = sadd.s32 %s123, 1
      %s125 = scalar_select %p122, %s123, %s124
      %p128 = pneg %p122
      %p129 = scmp.eq.s32.totalorder %s19, 1
      %p130 = por %p128, %p129
      %p131 = scmp.ne.s32.totalorder %s123, %s126
      %p132 = scmp.eq.s32.totalorder %s19, 0
      %p133 = por %p131, %p132
      %p134 = scmp.ne.s32.totalorder %s123, %s126
      %p135 = scmp.eq.s32.totalorder %s24, 1
      %p136 = por %p134, %p135
      %p137 = scmp.ne.s32.totalorder %s126, %s127
      %p138 = scmp.eq.s32.totalorder %s24, 0
      %p139 = por %p137, %p138
      %p140 = scmp.ne.s32.totalorder %s126, %s127
      %p141 = scmp.eq.s32.totalorder %s25, 1
      %p142 = por %p140, %p141
      %p144 = scmp.ne.s32.totalorder %s127, %s143
      %p145 = scmp.eq.s32.totalorder %s25, 0
      %p146 = por %p144, %p145
      %p147 = scmp.le.s32.totalorder 1, %s19
      %p148 = scmp.lt.s32.totalorder %s19, 3
      %p149 = pnand %p147, %p148
      %p150 = pneg %p149
      // Predicated region
      $region9: #{tpu_custom_call.1} parent=5 // pred_check
        _
      $region10: #{tpu_custom_call.1} parent=5 // pred_check_branch
        %152 = sbr.rel (%p149) target = $region12
      $region11: #{tpu_custom_call.1} parent=5 // pred_region
        %s153 = ssub.s32 %s19, 1
        // Predicated region
        $region13: #{tpu_custom_call.1} parent=11 // pred_check
          %p154 = pneg %p92
        $region14: #{tpu_custom_call.1} parent=11 // pred_check_branch
          %156 = sbr.rel (%p154) target = $region16
        $region15: #{tpu_custom_call.1} parent=11 // pred_region
          %s158 = ssub.s32 1024, 1024
          %159 = vsyncadd [#allocation6], %s158
          %s160 = sshll.u32 [#allocation7], 4
          %s161 = int_to_ptr.vmem [resolvable:$true] %s160
          %166 = dma.hbm_to_vmem [thread:$0]  %s2, 1024, %s161, [#allocation6], 64, 64, 4
        $region16: #{tpu_custom_call.1} parent=11 // pred_fallthru
          _
        // Predicated region
        $region17: #{tpu_custom_call.1} parent=11 // pred_check
          %p167 = pneg %p113
        $region18: #{tpu_custom_call.1} parent=11 // pred_check_branch
          %169 = sbr.rel (%p167) target = $region20
        $region19: #{tpu_custom_call.1} parent=11 // pred_region
          _
        $region20: #{tpu_custom_call.1} parent=11 // pred_fallthru
          _
      $region12: #{tpu_custom_call.1} parent=5 // pred_fallthru
        _
      %p170 = scmp.lt.s32.totalorder %s19, 2
      // Predicated region
      $region21: #{tpu_custom_call.1} parent=5 // pred_check
        %p171 = pneg %p170
      $region22: #{tpu_custom_call.1} parent=5 // pred_check_branch
        %173 = sbr.rel (%p171) target = $region24
      $region23: #{tpu_custom_call.1} parent=5 // pred_region
        // Predicated region
        $region25: #{tpu_custom_call.1} parent=23 // pred_check
          %p174 = pneg %p39
        $region26: #{tpu_custom_call.1} parent=23 // pred_check_branch
          %176 = sbr.rel (%p174) target = $region28
        $region27: #{tpu_custom_call.1} parent=23 // pred_region
          %s177 = sand.u32 %s29, 1
          %s178 = scalar_lea.sflag [#allocation3], %s177
          %s179 = sand.u32 %s29, 1
          %s180 = smul.addr %s179, 8
          %s181 = scalar_lea.vmem [#allocation2], %s180
          %s183 = ssub.s32 128, 128
          %184 = vsyncadd %s178, %s183
          %s185 = smul.addr %s19, 128
          %s186 = scalar_lea.hbm %s0, %s185
          %s188 = sshll.u32 %s181, 4
          %s189 = int_to_ptr.vmem [resolvable:$true] %s188
          %191 = dma.hbm_to_vmem [thread:$0]  %s186, 128, %s189, %s178
        $region28: #{tpu_custom_call.1} parent=23 // pred_fallthru
          _
        // Predicated region
        $region29: #{tpu_custom_call.1} parent=23 // pred_check
          %p192 = pneg %p65
        $region30: #{tpu_custom_call.1} parent=23 // pred_check_branch
          %194 = sbr.rel (%p192) target = $region32
        $region31: #{tpu_custom_call.1} parent=23 // pred_region
          %s195 = sand.u32 %s19, 1
          %s196 = scalar_lea.sflag [#allocation6], %s195
          %s197 = sand.u32 %s55, 1
          %s198 = smul.addr %s197, 8
          %s199 = scalar_lea.vmem [#allocation5], %s198
          %s201 = ssub.s32 128, 128
          %202 = vsyncadd %s196, %s201
          %s203 = smul.addr %s19, 128
          %s204 = scalar_lea.hbm %s1, %s203
          %s206 = sshll.u32 %s199, 4
          %s207 = int_to_ptr.vmem [resolvable:$true] %s206
          %209 = dma.hbm_to_vmem [thread:$0]  %s204, 128, %s207, %s196
        $region32: #{tpu_custom_call.1} parent=23 // pred_fallthru
          _
      $region24: #{tpu_custom_call.1} parent=5 // pred_fallthru
        _
      %p210 = scmp.le.s32.totalorder 1, %s19
      %p211 = scmp.lt.s32.totalorder %s19, 3
      %p212 = pnand %p210, %p211
      %p213 = pneg %p212
      // Predicated region
      $region33: #{tpu_custom_call.1} parent=5 // pred_check
        _
      $region34: #{tpu_custom_call.1} parent=5 // pred_check_branch
        %215 = sbr.rel (%p212) target = $region36
      $region35: #{tpu_custom_call.1} parent=5 // pred_region
        %s216 = ssub.s32 %s19, 1
        %s217 = sand.u32 %s32, 1
        %s218 = scalar_lea.sflag [#allocation3], %s217
        %s219 = sand.u32 %s32, 1
        %s220 = smul.addr %s219, 8
        %s221 = scalar_lea.vmem [#allocation2], %s220
        // Predicated region
        $region37: #{tpu_custom_call.1} parent=35 // pred_check
          %p222 = pneg %p45
        $region38: #{tpu_custom_call.1} parent=35 // pred_check_branch
          %224 = sbr.rel (%p222) target = $region40
        $region39: #{tpu_custom_call.1} parent=35 // pred_region
          %225 = dma.done %s218, 128
        $region40: #{tpu_custom_call.1} parent=35 // pred_fallthru
          _
        %s226 = sand.u32 %s24, 1
        %s227 = scalar_lea.sflag [#allocation6], %s226
        %s228 = sand.u32 %s58, 1
        %s229 = smul.addr %s228, 8
        %s230 = scalar_lea.vmem [#allocation5], %s229
        // Predicated region
        $region41: #{tpu_custom_call.1} parent=35 // pred_check
          %p231 = pneg %p71
        $region42: #{tpu_custom_call.1} parent=35 // pred_check_branch
          %233 = sbr.rel (%p231) target = $region44
        $region43: #{tpu_custom_call.1} parent=35 // pred_region
          %234 = dma.done %s227, 128
        $region44: #{tpu_custom_call.1} parent=35 // pred_fallthru
          _
        // Predicated region
        $region45: #{tpu_custom_call.1} parent=35 // pred_check
          %p235 = pneg %p92
        $region46: #{tpu_custom_call.1} parent=35 // pred_check_branch
          %237 = sbr.rel (%p235) target = $region48
        $region47: #{tpu_custom_call.1} parent=35 // pred_region
          %238 = dma.done [#allocation6], 1024
        $region48: #{tpu_custom_call.1} parent=35 // pred_fallthru
          _
        %s239 = sand.u32 %s32, 1
        %s240 = scalar_lea.sflag [#allocation3], %s239
        %s241 = sand.u32 %s32, 1
        %s242 = smul.addr %s241, 8
        %s243 = scalar_lea.vmem [#allocation2], %s242
        %p244 = pneg %p45
        %p245 = pneg %p42
        %s246 = sand.u32 %s24, 1
        %s247 = scalar_lea.sflag [#allocation6], %s246
        %s248 = sand.u32 %s58, 1
        %s249 = smul.addr %s248, 8
        %s250 = scalar_lea.vmem [#allocation5], %s249
        %p251 = pneg %p71
        %p252 = pneg %p68
        %p253 = pneg %p92
        %p254 = pneg %p89
        %p255 = pneg %p113
        %p256 = pneg %p110
        %p257 = pneg %p139
        %p258 = pneg %p136
        %s259 = sand.u32 %s126, 1
        %s260 = scalar_lea.sflag [#allocation4], %s259
        %s261 = sand.u32 %s126, 1
        %s262 = smul.addr %s261, 8
        %s263 = scalar_lea.vmem [#allocation8], %s262
        %v265 = vld [vmem:[%s221] sm:$0xff]
        %v266 = vld [vmem:[%s230] sm:$0xff]
        %v267 = vld [vmem:[%s3] sm:$0xff]
        %v268 = vpack.c.bf16 %v265, %v265
        %v269 = vld [vmem:[#allocation7] sm:$0xf]
        %v270 = vld [vmem:[#allocation7 + $0x4] sm:$0xf]
        %v271 = vld [vmem:[#allocation7 + $0x8] sm:$0xf]
        %v272 = vld [vmem:[#allocation7 + $0xc] sm:$0xf]
        %v273 = vld [vmem:[#allocation7 + $0x10] sm:$0xf]
        %v274 = vld [vmem:[#allocation7 + $0x14] sm:$0xf]
        %v275 = vld [vmem:[#allocation7 + $0x18] sm:$0xf]
        %v276 = vld [vmem:[#allocation7 + $0x1c] sm:$0xf]
        %v277 = vld [vmem:[#allocation7 + $0x20] sm:$0xf]
        %v278 = vld [vmem:[#allocation7 + $0x24] sm:$0xf]
        %v279 = vld [vmem:[#allocation7 + $0x28] sm:$0xf]
        %v280 = vld [vmem:[#allocation7 + $0x2c] sm:$0xf]
        %v281 = vld [vmem:[#allocation7 + $0x30] sm:$0xf]
        %v282 = vld [vmem:[#allocation7 + $0x34] sm:$0xf]
        %v283 = vld [vmem:[#allocation7 + $0x38] sm:$0xf]
        %v284 = vld [vmem:[#allocation7 + $0x3c] sm:$0xf]
        %v285 = vlaneseq
        %v286 = vshrl.u32 %v285, 7
        %v287 = vsub.s32 0, %v286
        %v288 = vrot.slane %v267, %v287
        %v305 = vunpack.c.l.b16 %v269
        %v306 = vunpack.c.l.b16 %v270
        %v307 = vunpack.c.l.b16 %v271
        %v308 = vunpack.c.l.b16 %v272
        %v309 = vunpack.c.l.b16 %v273
        %v310 = vunpack.c.l.b16 %v274
        %v311 = vunpack.c.l.b16 %v275
        %v312 = vunpack.c.l.b16 %v276
        %v313 = vunpack.c.l.b16 %v277
        %v314 = vunpack.c.l.b16 %v278
        %v315 = vunpack.c.l.b16 %v279
        %v316 = vunpack.c.l.b16 %v280
        %v317 = vunpack.c.l.b16 %v281
        %v318 = vunpack.c.l.b16 %v282
        %v319 = vunpack.c.l.b16 %v283
        %v320 = vunpack.c.l.b16 %v284
        %v321 = vpack.c.b16 %v306, %v305
        %v322 = vpack.c.b16 %v308, %v307
        %v323 = vpack.c.b16 %v310, %v309
        %v324 = vpack.c.b16 %v312, %v311
        %v325 = vpack.c.b16 %v314, %v313
        %v326 = vpack.c.b16 %v316, %v315
        %v327 = vpack.c.b16 %v318, %v317
        %v328 = vpack.c.b16 %v320, %v319
        %337 = vmatprep.subr.bf16.mxu0 0
        %338 = vmatpush1.bf16.msra.mxu0 %v321
        %339 = vmatprep.subr.bf16.mxu0 0
        %340 = vmatpush1.bf16.msra.mxu0 %v322
        %341 = vmatprep.subr.bf16.mxu0 0
        %342 = vmatpush1.bf16.msra.mxu0 %v323
        %343 = vmatprep.subr.bf16.mxu0 0
        %344 = vmatpush1.bf16.msra.mxu0 %v324
        %345 = vmatprep.subr.bf16.mxu0 0
        %346 = vmatpush1.bf16.msra.mxu0 %v325
        %347 = vmatprep.subr.bf16.mxu0 0
        %348 = vmatpush1.bf16.msra.mxu0 %v326
        %349 = vmatprep.subr.bf16.mxu0 0
        %350 = vmatpush1.bf16.msra.mxu0 %v327
        %351 = vmatprep.subr.bf16.mxu0 0
        %352 = vmatpush1.bf16.msra.mxu0 %v328
        %353 = vmatprep.subr.bf16.mxu0 0
        %354 = vmatpush1.bf16.msra.mxu0 0
        %355 = vmatprep.subr.bf16.mxu0 0
        %356 = vmatpush1.bf16.msra.mxu0 0
        %357 = vmatprep.subr.bf16.mxu0 0
        %358 = vmatpush1.bf16.msra.mxu0 0
        %359 = vmatprep.subr.bf16.mxu0 0
        %360 = vmatpush1.bf16.msra.mxu0 0
        %361 = vmatprep.subr.bf16.mxu0 0
        %362 = vmatpush1.bf16.msra.mxu0 0
        %363 = vmatprep.subr.bf16.mxu0 0
        %364 = vmatpush1.bf16.msra.mxu0 0
        %365 = vmatprep.subr.bf16.mxu0 0
        %366 = vmatpush1.bf16.msra.mxu0 0
        %367 = vmatprep.subr.bf16.mxu0 0
        %368 = vmatpush1.bf16.msra.mxu0 0
        %369 = vmatprep.mubr.bf16.mxu0 0
        %370 = vmatmul.mubr.bf16.gmra.mrb[0].mxu0 %v268
        %v371 = vpop.f32.mrb[0].mxu0
        %v372 = vadd.f32 %v288, %v371
        %v373 = vpop.f32.mrb[0].mxu0
        %v374 = vpop.f32.mrb[0].mxu0
        %v375 = vpop.f32.mrb[0].mxu0
        %376 = vdwg.mxu0
        %v377 = vadd.f32 %v372, %v266
        %378 = vadd.xlane.f32.xlu0 %v377
        %v379 = vpop.xlane.xlu0 %378
        %v380 = vrcp.pop 128.0
        %v381 = vmul.f32 %v379, %v380
        %v382 = vmul.f32 %v377, %v377
        %383 = vadd.xlane.f32.xlu0 %v382
        %v384 = vpop.xlane.xlu0 %383
        %v385 = vmul.f32 %v384, %v380
        %v386 = vmul.f32 %v381, %v381
        %v387 = vsub.f32 %v385, %v386
        %v388 = vmax.f32 %v387, 0.0
        %v389 = vsub.f32 %v377, %v381
        %v390 = vadd.f32 %v388, 1e-12
        %v391 = vrsqrt.pop %v390
        %v392 = vmul.f32 %v389, %v391
        %v393 = vlaneseq
        %v394 = vshrl.u32 %v393, 7
        %v395 = vsub.s32 1, %v394
        %v396 = vrot.slane %v267, %v395
        %v397 = vmul.f32 %v396, %v392
        %v398 = vlaneseq
        %v399 = vshrl.u32 %v398, 7
        %v400 = vsub.s32 2, %v399
        %v401 = vrot.slane %v267, %v400
        %v402 = vadd.f32 %v397, %v401
        %403 = vst [vmem:[%s263] sm:$0xff] %v402
        %s404 = sand.u32 %s126, 1
        %s405 = scalar_lea.sflag [#allocation4], %s404
        %s406 = sand.u32 %s126, 1
        %s407 = smul.addr %s406, 8
        %s408 = scalar_lea.vmem [#allocation8], %s407
        // Predicated region
        $region49: #{tpu_custom_call.1} parent=35 // pred_check
          %p409 = pneg %p136
        $region50: #{tpu_custom_call.1} parent=35 // pred_check_branch
          %411 = sbr.rel (%p409) target = $region52
        $region51: #{tpu_custom_call.1} parent=35 // pred_region
          %s413 = ssub.s32 128, 128
          %414 = vsyncadd %s405, %s413
          %s415 = smul.addr %s24, 128
          %s416 = scalar_lea.hbm %s4, %s415
          %s418 = sshll.u32 %s408, 4
          %s419 = int_to_ptr.vmem [resolvable:$true] %s418
          %421 = dma.vmem_to_hbm [thread:$0]  %s419, 128, %s416, %s405
        $region52: #{tpu_custom_call.1} parent=35 // pred_fallthru
          _
      $region36: #{tpu_custom_call.1} parent=5 // pred_fallthru
        _
      %p422 = scmp.le.s32.totalorder 2, %s19
      // Predicated region
      $region53: #{tpu_custom_call.1} parent=5 // pred_check
        %p423 = pneg %p422
      $region54: #{tpu_custom_call.1} parent=5 // pred_check_branch
        %425 = sbr.rel (%p423) target = $region56
      $region55: #{tpu_custom_call.1} parent=5 // pred_region
        %s426 = ssub.s32 %s19, 2
        // Predicated region
        $region57: #{tpu_custom_call.1} parent=55 // pred_check
          %p427 = pneg %p142
        $region58: #{tpu_custom_call.1} parent=55 // pred_check_branch
          %429 = sbr.rel (%p427) target = $region60
        $region59: #{tpu_custom_call.1} parent=55 // pred_region
          %s430 = sand.u32 %s127, 1
          %s431 = scalar_lea.sflag [#allocation4], %s430
          %s432 = sand.u32 %s127, 1
          %s433 = smul.addr %s432, 8
          %s434 = scalar_lea.vmem [#allocation8], %s433
          %435 = dma.done %s431, 128
        $region60: #{tpu_custom_call.1} parent=55 // pred_fallthru
          _
      $region56: #{tpu_custom_call.1} parent=5 // pred_fallthru
        _
    $region6: #{tpu_custom_call.1} parent=1 // loop_footer
      %s23 = sadd.s32 1, %s19
    $region7: #{tpu_custom_call.1} parent=1 // loop_footer_branch
      %18 = sbr.rel target = $region3
    $region8: #{tpu_custom_call.1} parent=1 // loop_exit
      _
    %436 = vsyncpa [#allocation3], 1
    %s437 = scalar_lea.sflag [#allocation3], 1
    %438 = vsyncpa %s437, 1
    %439 = vsyncpa [#allocation6], 1
    %s440 = scalar_lea.sflag [#allocation6], 1
    %441 = vsyncpa %s440, 1
    %442 = vsyncpa [#allocation4], 1
    %s443 = scalar_lea.sflag [#allocation4], 1
    %444 = vsyncpa %s443, 1

</llo_original>
